<compile_context>
chip_gen: v7x
topology: tpu7x:2x2x1
jax: 0.10.0
libtpu: 0.0.40
codegen_flags: <defaults>
</compile_context>

<pallas_src>
import math

import jax
import jax.numpy as jnp
from jax.experimental import pallas as pl
from jax.experimental.pallas import tpu as pltpu


def _round_up(x, m):
    return ((x + m - 1) // m) * m


# ---------------------------------------------------------------------------
# Kernels
# ---------------------------------------------------------------------------
def _ffn_kernel_fused(x_ref, w1_ref, b1_ref, w2_ref, b2_ref, o_ref):
    """y = relu(x @ w1 + b1) @ w2 + b2 with the whole d_ff resident in VMEM."""
    h = jnp.dot(x_ref[...], w1_ref[...], preferred_element_type=jnp.float32)
    h = jnp.maximum(h + b1_ref[...].astype(jnp.float32), 0.0)
    y = jnp.dot(h.astype(w2_ref.dtype), w2_ref[...],
                preferred_element_type=jnp.float32)
    o_ref[...] = (y + b2_ref[...].astype(jnp.float32)).astype(o_ref.dtype)


def _ffn_kernel_reduce(x_ref, w1_ref, b1_ref, w2_ref, b2_ref, o_ref, acc_ref):
    """One (row-tile, ff-tile) grid step; d_ff is the reduction grid axis.

    Shapes seen by the kernel:
      x_ref  : (tile_rows, d_model_p)
      w1_ref : (d_model_p, tile_ff)      b1_ref : (1, tile_ff)
      w2_ref : (tile_ff, d_model_p)      b2_ref : (1, d_model_p)
      o_ref  : (tile_rows, d_model_p)    -- resident across the ff axis
      acc_ref: (tile_rows, d_model_p) f32 scratch accumulator
    """
    j = pl.program_id(1)

    h = jnp.dot(x_ref[...], w1_ref[...], preferred_element_type=jnp.float32)
    h = jnp.maximum(h + b1_ref[...].astype(jnp.float32), 0.0)
    partial = jnp.dot(h.astype(w2_ref.dtype), w2_ref[...],
                      preferred_element_type=jnp.float32)

    # Fold the accumulator init into the first reduction step (saves a full
    # tile zero-store plus a load+add per row tile).
    @pl.when(j == 0)
    def _():
        acc_ref[...] = partial

    @pl.when(j > 0)
    def _():
        acc_ref[...] += partial

    @pl.when(j == pl.num_programs(1) - 1)
    def _():
        o_ref[...] = (acc_ref[...] +
                      b2_ref[...].astype(jnp.float32)).astype(o_ref.dtype)


# ---------------------------------------------------------------------------
# Wrapper
# ---------------------------------------------------------------------------
def _chip_budget():
    """Return (vmem_limit_cap_bytes, default_tile_rows, small_vmem_chip)."""
    try:
        phys = int(pltpu.get_tpu_info().vmem_capacity_bytes)
    except Exception:
        phys = 64 << 20  # conservative fallback: safe on every generation
    if phys >= (100 << 20):          # v5e / v6e: 128 MiB physical VMEM, 1 TC
        return 100 << 20, 1024, False
    return 56 << 20, 512, True       # v7x-like: 64 MiB physical, 2 TCs


def pointwise_ffn(x, w1, b1, w2, b2, *, tile_rows=None, tile_ff=None):
    """x: (..., d_model) -> (..., d_model).  w1: (d_model, d_ff), w2: (d_ff, d_model)."""
    d_model = x.shape[-1]
    d_ff = w1.shape[-1]
    lead_shape = x.shape[:-1]
    rows = math.prod(lead_shape) if lead_shape else 1
    x2d = x.reshape(rows, d_model)

    x_item = jnp.dtype(x.dtype).itemsize
    w_item = jnp.dtype(w1.dtype).itemsize
    b_item = jnp.dtype(b1.dtype).itemsize

    vmem_cap, default_rows, small_vmem = _chip_budget()

    # Sublane-packing multiple for the activation dtype (8 f32, 16 bf16, 32 i8).
    row_mult = max(8, 32 // x_item)

    # ---- MXU / lane friendly padded sizes ----------------------------------
    # d_model padded to 256: v6e/v7x MXUs are 256x256 (harmless on v5e).
    d_model_p = _round_up(d_model, 256)
    d_ff_p = _round_up(d_ff, 128)

    # ---- tile selection (flops per streamed weight byte == tile_rows) ------
    if tile_rows is None:
        tile_rows = default_rows
    if tile_ff is None:
        tile_ff = 512
    tile_ff = min(_round_up(tile_ff, 128), d_ff_p)
    d_ff_p = _round_up(d_ff_p, tile_ff)

    # On 2-TC chips make sure the parallel row axis has >= 2 tiles so both
    # TensorCores get work, even for decode-like small-row inputs.
    if small_vmem and rows > row_mult:
        tile_rows = min(tile_rows, _round_up(-(-rows // 2), row_mult))
    tile_rows = _round_up(min(tile_rows, _round_up(rows, row_mult)), row_mult)

    fused = d_ff_p <= tile_ff          # whole hidden dim resident in VMEM
    if fused:
        tile_ff = d_ff_p

    def _vmem_est(tr, tf):
        # f32 h intermediate plus its cast copy when weights are sub-32-bit.
        h_bytes = tr * tf * (4 + (w_item if w_item != 4 else 0))
        w_bufs = 1 if fused else 2
        est = (2 * tr * d_model_p * x_item            # x (double-buffered)
               + w_bufs * d_model_p * tf * w_item     # w1
               + w_bufs * tf * b_item                 # b1
               + w_bufs * tf * d_model_p * w_item     # w2
               + d_model_p * b_item                   # b2 (resident)
               + 2 * tr * d_model_p * x_item          # out (double-buffered)
               + h_bytes)
        if not fused:
            est += tr * d_model_p * 4                 # f32 accumulator scratch
        return est

    # Shrink to fit the per-generation VMEM budget: rows first (keep tile_ff
    # >= 512 so the strided w1 DMA keeps >= 1 KiB chunks), then tile_ff.
    while _vmem_est(tile_rows, tile_ff) > vmem_cap and tile_rows > row_mult:
        tile_rows = max(row_mult, _round_up(tile_rows // 2, row_mult))
    while (_vmem_est(tile_rows, tile_ff) > vmem_cap and not fused
           and tile_ff > 128):
        tile_ff = max(128, tile_ff // 2)
        d_ff_p = _round_up(_round_up(d_ff, 128), tile_ff)

    rows_p = _round_up(rows, tile_rows)

    # ---- zero padding (semantically neutral, sliced off at the end) --------
    if (rows_p, d_model_p) != (rows, d_model):
        x2d = jnp.pad(x2d, ((0, rows_p - rows), (0, d_model_p - d_model)))
    w1p = w1
    if (d_model_p, d_ff_p) != (d_model, d_ff):
        w1p = jnp.pad(w1, ((0, d_model_p - d_model), (0, d_ff_p - d_ff)))
    b1p = b1.reshape(1, d_ff)
    if d_ff_p != d_ff:
        b1p = jnp.pad(b1p, ((0, 0), (0, d_ff_p - d_ff)))
    w2p = w2
    if (d_ff_p, d_model_p) != (d_ff, d_model):
        w2p = jnp.pad(w2, ((0, d_ff_p - d_ff), (0, d_model_p - d_model)))
    b2p = b2.reshape(1, d_model)
    if d_model_p != d_model:
        b2p = jnp.pad(b2p, ((0, 0), (0, d_model_p - d_model)))

    n_row = rows_p // tile_rows
    resident = pl.Buffered(1)   # single-buffer inputs whose block never changes

    if fused:
        grid = (n_row,)
        in_specs = [
            pl.BlockSpec((tile_rows, d_model_p), lambda i: (i, 0)),
            pl.BlockSpec((d_model_p, d_ff_p), lambda i: (0, 0),
                         pipeline_mode=resident),
            pl.BlockSpec((1, d_ff_p), lambda i: (0, 0),
                         pipeline_mode=resident),
            pl.BlockSpec((d_ff_p, d_model_p), lambda i: (0, 0),
                         pipeline_mode=resident),
            pl.BlockSpec((1, d_model_p), lambda i: (0, 0),
                         pipeline_mode=resident),
        ]
        out_spec = pl.BlockSpec((tile_rows, d_model_p), lambda i: (i, 0))
        kernel = _ffn_kernel_fused
        scratch = []
        dims = ("parallel",)
    else:
        n_ff = d_ff_p // tile_ff
        grid = (n_row, n_ff)
        in_specs = [
            pl.BlockSpec((tile_rows, d_model_p), lambda i, j: (i, 0)),
            pl.BlockSpec((d_model_p, tile_ff), lambda i, j: (0, j)),
            pl.BlockSpec((1, tile_ff), lambda i, j: (0, j)),
            pl.BlockSpec((tile_ff, d_model_p), lambda i, j: (j, 0)),
            pl.BlockSpec((1, d_model_p), lambda i, j: (0, 0),
                         pipeline_mode=resident),
        ]
        out_spec = pl.BlockSpec((tile_rows, d_model_p), lambda i, j: (i, 0))
        kernel = _ffn_kernel_reduce
        scratch = [pltpu.VMEM((tile_rows, d_model_p), jnp.float32)]
        dims = ("parallel", "arbitrary")

    vmem_limit = min(max(int(_vmem_est(tile_rows, tile_ff) * 1.2), 32 << 20),
                     vmem_cap)

    out = pl.pallas_call(
        kernel,
        out_shape=jax.ShapeDtypeStruct((rows_p, d_model_p), x.dtype),
        grid_spec=pltpu.PrefetchScalarGridSpec(
            num_scalar_prefetch=0,
            grid=grid,
            in_specs=in_specs,
            out_specs=out_spec,
            scratch_shapes=scratch,
        ),
        compiler_params=pltpu.CompilerParams(
            dimension_semantics=dims,
            vmem_limit_bytes=vmem_limit,
        ),
    )(x2d, w1p, b1p, w2p, b2p)

    out = out[:rows, :d_model]
    return out.reshape(*lead_shape, d_model)


def init_params(key, d_model, d_ff, dtype=jnp.float32):
    """Deterministic init matching PyTorch nn.Linear default:
    U(-1/sqrt(fan_in), 1/sqrt(fan_in)) for both weight and bias."""
    k1, k2, k3, k4 = jax.random.split(key, 4)
    bound1 = 1.0 / math.sqrt(d_model)
    bound2 = 1.0 / math.sqrt(d_ff)
    # Stored pre-transposed vs. PyTorch: (in, out)
    w1 = jax.random.uniform(k1, (d_model, d_ff), dtype, -bound1, bound1)
    b1 = jax.random.uniform(k2, (d_ff,), dtype, -bound1, bound1)
    w2 = jax.random.uniform(k3, (d_ff, d_model), dtype, -bound2, bound2)
    b2 = jax.random.uniform(k4, (d_model,), dtype, -bound2, bound2)
    return w1, b1, w2, b2


if __name__ == "__main__":
    key = jax.random.PRNGKey(0)
    batch, seq, d_model, d_ff = 2, 8, 32, 64

    kx, kp = jax.random.split(key)
    x = jax.random.normal(kx, (batch, seq, d_model), jnp.float32)
    w1, b1, w2, b2 = init_params(kp, d_model, d_ff)

    y = pointwise_ffn(x, w1, b1, w2, b2)
    y = jax.block_until_ready(y)

    # Reference check in plain JAX (same math as the PyTorch module).
    # NOTE: tolerance is for f32 params; bf16 params would need a looser bound.
    ref = jnp.maximum(x @ w1 + b1, 0.0) @ w2 + b2
    assert y.shape == x.shape
    assert jnp.allclose(y, ref, atol=1e-5, rtol=1e-5), float(jnp.abs(y - ref).max())

    print("KERNEL_OK")
</pallas_src>

<mosaic_0001>
module attributes {stable_mosaic.version = 11 : i64} {
  func.func @_ffn_kernel_fused(%arg0: i32, %arg1: memref<8x256xf32, #tpu.memory_space<vmem>>, %arg2: memref<256x128xf32, #tpu.memory_space<vmem>>, %arg3: memref<1x128xf32, #tpu.memory_space<vmem>>, %arg4: memref<128x256xf32, #tpu.memory_space<vmem>>, %arg5: memref<1x256xf32, #tpu.memory_space<vmem>>, %arg6: memref<8x256xf32, #tpu.memory_space<vmem>>) attributes {dimension_semantics = [#tpu.dimension_semantics<parallel>], iteration_bounds = array<i64: 2>, scalar_prefetch = 0 : i64, scratch_operands = 0 : i64, tpu.core_type = #tpu.core_type<tc>, window_params = [{transform_indices = @transform_0, window_bounds = array<i64: 8, 256>}, {pipeline_mode = #tpu.pipeline_mode<synchronous>, transform_indices = @transform_1, window_bounds = array<i64: 256, 128>}, {pipeline_mode = #tpu.pipeline_mode<synchronous>, transform_indices = @transform_2, window_bounds = array<i64: 1, 128>}, {pipeline_mode = #tpu.pipeline_mode<synchronous>, transform_indices = @transform_3, window_bounds = array<i64: 128, 256>}, {pipeline_mode = #tpu.pipeline_mode<synchronous>, transform_indices = @transform_4, window_bounds = array<i64: 1, 256>}, {transform_indices = @transform_5, window_bounds = array<i64: 8, 256>}]} {
    %c0 = arith.constant 0 : index
    %c0_0 = arith.constant 0 : index
    %0 = vector.load %arg1[%c0, %c0_0] : memref<8x256xf32, #tpu.memory_space<vmem>>, vector<8x256xf32>
    %c0_1 = arith.constant 0 : index
    %c0_2 = arith.constant 0 : index
    %1 = vector.load %arg2[%c0_1, %c0_2] : memref<256x128xf32, #tpu.memory_space<vmem>>, vector<256x128xf32>
    %cst = arith.constant dense<0.000000e+00> : vector<8x128xf32>
    %2 = tpu.matmul %0, %1, %cst {dimension_numbers = #tpu.dot_dimension_numbers<[1], [0], [0], [1], [0, 0, 1, 1], [], []>} : vector<8x256xf32>, vector<256x128xf32>, vector<8x128xf32> -> vector<8x128xf32>
    %c0_3 = arith.constant 0 : index
    %c0_4 = arith.constant 0 : index
    %3 = vector.load %arg3[%c0_3, %c0_4] : memref<1x128xf32, #tpu.memory_space<vmem>>, vector<1x128xf32>
    %4 = vector.broadcast %3 : vector<1x128xf32> to vector<8x128xf32>
    %5 = arith.addf %2, %4 : vector<8x128xf32>
    %cst_5 = arith.constant 0.000000e+00 : f32
    %6 = vector.broadcast %cst_5 : f32 to vector<8x128xf32>
    %7 = arith.maximumf %5, %6 : vector<8x128xf32>
    %c0_6 = arith.constant 0 : index
    %c0_7 = arith.constant 0 : index
    %8 = vector.load %arg4[%c0_6, %c0_7] : memref<128x256xf32, #tpu.memory_space<vmem>>, vector<128x256xf32>
    %cst_8 = arith.constant dense<0.000000e+00> : vector<8x256xf32>
    %9 = tpu.matmul %7, %8, %cst_8 {dimension_numbers = #tpu.dot_dimension_numbers<[1], [0], [0], [1], [0, 0, 1, 1], [], []>} : vector<8x128xf32>, vector<128x256xf32>, vector<8x256xf32> -> vector<8x256xf32>
    %c0_9 = arith.constant 0 : index
    %c0_10 = arith.constant 0 : index
    %10 = vector.load %arg5[%c0_9, %c0_10] : memref<1x256xf32, #tpu.memory_space<vmem>>, vector<1x256xf32>
    %11 = vector.broadcast %10 : vector<1x256xf32> to vector<8x256xf32>
    %12 = arith.addf %9, %11 : vector<8x256xf32>
    %c0_11 = arith.constant 0 : index
    %c0_12 = arith.constant 0 : index
    %13 = vector.load %arg6[%c0_11, %c0_12] : memref<8x256xf32, #tpu.memory_space<vmem>>, vector<8x256xf32>
    tpu.vector_store %arg6[%c0_11, %c0_12], %12 {strides = array<i32>} : memref<8x256xf32, #tpu.memory_space<vmem>>, vector<8x256xf32>,
    return
  }
  func.func @transform_0(%arg0: i32) -> (i32, i32) {
    %c0_i32 = arith.constant 0 : i32
    %c0_i32_0 = arith.constant 0 : i32
    return %arg0, %c0_i32 : i32, i32
  }
  func.func @transform_1(%arg0: i32) -> (i32, i32) {
    %c0_i32 = arith.constant 0 : i32
    %c0_i32_0 = arith.constant 0 : i32
    %c0_i32_1 = arith.constant 0 : i32
    return %c0_i32, %c0_i32_0 : i32, i32
  }
  func.func @transform_2(%arg0: i32) -> (i32, i32) {
    %c0_i32 = arith.constant 0 : i32
    %c0_i32_0 = arith.constant 0 : i32
    %c0_i32_1 = arith.constant 0 : i32
    return %c0_i32, %c0_i32_0 : i32, i32
  }
  func.func @transform_3(%arg0: i32) -> (i32, i32) {
    %c0_i32 = arith.constant 0 : i32
    %c0_i32_0 = arith.constant 0 : i32
    %c0_i32_1 = arith.constant 0 : i32
    return %c0_i32, %c0_i32_0 : i32, i32
  }
  func.func @transform_4(%arg0: i32) -> (i32, i32) {
    %c0_i32 = arith.constant 0 : i32
    %c0_i32_0 = arith.constant 0 : i32
    %c0_i32_1 = arith.constant 0 : i32
    return %c0_i32, %c0_i32_0 : i32, i32
  }
  func.func @transform_5(%arg0: i32) -> (i32, i32) {
    %c0_i32 = arith.constant 0 : i32
    %c0_i32_0 = arith.constant 0 : i32
    return %arg0, %c0_i32 : i32, i32
  }
}

</mosaic_0001>

<llo_original>
// kernel: tpu_custom_call.1
$region0: #{tpu_custom_call.1}
  #allocation0 [shape = 'u32[]', space=smem, size = 0x4, offset = 0x4, fixed_abs, tag = 'smem constant byte address 0x4 - core index']
  #allocation1 [shape = 'u32[144,128]{1,0:T(1,128)}', space=vmem, size = 0x12000, scoped, tag = 'internal scratch']
  %s0 = inlined_call_operand.hbm [shape: f32[16,256], index: 0, kind: input, shape index: {}]
  %s1 = inlined_call_operand.hbm [shape: f32[256,128], index: 1, kind: input, shape index: {}]
  %s2 = inlined_call_operand.vmem [shape: f32[1,128], index: 2, kind: input, shape index: {}]
  %s3 = inlined_call_operand.hbm [shape: f32[128,256], index: 3, kind: input, shape index: {}]
  %s4 = inlined_call_operand.vmem [shape: f32[1,256], index: 4, kind: input, shape index: {}]
  %s5 = inlined_call_operand.hbm [shape: f32[16,256], index: 5, kind: output, shape index: {}]
  %s6 = sld [smem:[#allocation0]]
  $region65: #{tpu_custom_call.1} parent=0
    _
  %s8 = ssub.s32 1, %s6
  %s9 = scalar_select 0, %s8, %s6
  $region1: #{tpu_custom_call.1} parent=0
    #allocation2 [shape = 'u8[16384]{0}', space=vmem, size = 0x4000, scoped, tag = 'input window, operand 0']
    #allocation3 [shape = 's32[2]{0}', space=sflag, size = 0x8, scoped, tag = 'scoped memory for tpu_custom_call.1']
    #allocation4 [shape = 's32[2]{0}', space=sflag, size = 0x8, scoped, tag = 'scoped memory for tpu_custom_call.1']
    #allocation5 [shape = 'u8[131072]{0}', space=vmem, size = 0x20000, scoped, tag = 'input window, operand 1, single buffered']
    #allocation6 [shape = 's32[1]{0}', space=sflag, size = 0x4, scoped, tag = 'scoped memory for tpu_custom_call.1']
    #allocation7 [shape = 'u8[131072]{0}', space=vmem, size = 0x20000, scoped, tag = 'input window, operand 3, single buffered']
    #allocation8 [shape = 'u8[16384]{0}', space=vmem, size = 0x4000, scoped, tag = 'output window, operand 0']
    %10 = vsyncpa [#allocation3], 0
    %s11 = scalar_lea.sflag [#allocation3], 1
    %12 = vsyncpa %s11, 0
    %13 = vsyncpa [#allocation6], 0
    %14 = vsyncpa [#allocation4], 0
    %s15 = scalar_lea.sflag [#allocation4], 1
    %16 = vsyncpa %s15, 0
    loop: start=0, step=1, limit=4
    $region2: #{tpu_custom_call.1} parent=1 // loop_pre_header
      _
    $region3: #{tpu_custom_call.1} parent=1 // loop_header
      %s18 = sphi 0, %s22
      %p19 = scmp.ge.s32.totalorder %s18, 4
      %s28 = sphi 0, %s30
      %s31 = sphi 0, %s28
      %s32 = sphi 0, %s31
      %s48 = sphi 0, %s32
      %s52 = sphi 0, %s52
      %s54 = sphi 0, %s52
      %s55 = sphi 0, %s54
      %s69 = sphi 0, %s55
      %s73 = sphi 0, %s73
      %s75 = sphi 0, %s73
      %s76 = sphi 0, %s75
      %s90 = sphi 0, %s76
      %s94 = sphi 0, %s94
      %s96 = sphi 0, %s94
      %s97 = sphi 0, %s96
      %s111 = sphi 0, %s97
      %s115 = sphi 0, %s115
      %s117 = sphi 0, %s115
      %s118 = sphi 0, %s117
      %s132 = sphi 0, %s118
      %s138 = sphi 0, %s140
      %s141 = sphi 0, %s138
      %s142 = sphi 0, %s141
      %s158 = sphi 0, %s142
    $region4: #{tpu_custom_call.1} parent=1 // loop_header_branch
      %21 = sbr.rel (%p19) target = $region8
    $region5: #{tpu_custom_call.1} parent=1 // loop_body
      %s23 = ssub.s32 %s18, 1
      %s24 = ssub.s32 %s18, 2
      %s25 = sadd.s32 %s18, 1
      %s26 = ssub.s32 %s18, %s25
      %p27 = scmp.eq.s32.totalorder %s26, 0
      %s29 = sadd.s32 %s28, 1
      %s30 = scalar_select %p27, %s28, %s29
      %p33 = pneg %p27
      %p34 = scmp.eq.s32.totalorder %s18, 1
      %p35 = por %p33, %p34
      %p36 = scmp.ne.s32.totalorder %s28, %s31
      %p37 = scmp.eq.s32.totalorder %s18, 0
      %p38 = por %p36, %p37
      %p39 = scmp.ne.s32.totalorder %s28, %s31
      %p40 = scmp.eq.s32.totalorder %s23, 1
      %p41 = por %p39, %p40
      %p42 = scmp.ne.s32.totalorder %s31, %s32
      %p43 = scmp.eq.s32.totalorder %s23, 0
      %p44 = por %p42, %p43
      %p45 = scmp.ne.s32.totalorder %s31, %s32
      %p46 = scmp.eq.s32.totalorder %s24, 1
      %p47 = por %p45, %p46
      %p49 = scmp.ne.s32.totalorder %s32, %s48
      %p50 = scmp.eq.s32.totalorder %s24, 0
      %p51 = por %p49, %p50
      %s53 = sadd.s32 %s52, 1
      %p56 = scmp.eq.s32.totalorder %s18, 1
      %p57 = scmp.ne.s32.totalorder %s52, %s54
      %p58 = scmp.eq.s32.totalorder %s18, 0
      %p59 = por %p57, %p58
      %p60 = scmp.ne.s32.totalorder %s52, %s54
      %p61 = scmp.eq.s32.totalorder %s23, 1
      %p62 = por %p60, %p61
      %p63 = scmp.ne.s32.totalorder %s54, %s55
      %p64 = scmp.eq.s32.totalorder %s23, 0
      %p65 = por %p63, %p64
      %p66 = scmp.ne.s32.totalorder %s54, %s55
      %p67 = scmp.eq.s32.totalorder %s24, 1
      %p68 = por %p66, %p67
      %p70 = scmp.ne.s32.totalorder %s55, %s69
      %p71 = scmp.eq.s32.totalorder %s24, 0
      %p72 = por %p70, %p71
      %s74 = sadd.s32 %s73, 1
      %p77 = scmp.eq.s32.totalorder %s18, 1
      %p78 = scmp.ne.s32.totalorder %s73, %s75
      %p79 = scmp.eq.s32.totalorder %s18, 0
      %p80 = por %p78, %p79
      %p81 = scmp.ne.s32.totalorder %s73, %s75
      %p82 = scmp.eq.s32.totalorder %s23, 1
      %p83 = por %p81, %p82
      %p84 = scmp.ne.s32.totalorder %s75, %s76
      %p85 = scmp.eq.s32.totalorder %s23, 0
      %p86 = por %p84, %p85
      %p87 = scmp.ne.s32.totalorder %s75, %s76
      %p88 = scmp.eq.s32.totalorder %s24, 1
      %p89 = por %p87, %p88
      %p91 = scmp.ne.s32.totalorder %s76, %s90
      %p92 = scmp.eq.s32.totalorder %s24, 0
      %p93 = por %p91, %p92
      %s95 = sadd.s32 %s94, 1
      %p98 = scmp.eq.s32.totalorder %s18, 1
      %p99 = scmp.ne.s32.totalorder %s94, %s96
      %p100 = scmp.eq.s32.totalorder %s18, 0
      %p101 = por %p99, %p100
      %p102 = scmp.ne.s32.totalorder %s94, %s96
      %p103 = scmp.eq.s32.totalorder %s23, 1
      %p104 = por %p102, %p103
      %p105 = scmp.ne.s32.totalorder %s96, %s97
      %p106 = scmp.eq.s32.totalorder %s23, 0
      %p107 = por %p105, %p106
      %p108 = scmp.ne.s32.totalorder %s96, %s97
      %p109 = scmp.eq.s32.totalorder %s24, 1
      %p110 = por %p108, %p109
      %p112 = scmp.ne.s32.totalorder %s97, %s111
      %p113 = scmp.eq.s32.totalorder %s24, 0
      %p114 = por %p112, %p113
      %s116 = sadd.s32 %s115, 1
      %p119 = scmp.eq.s32.totalorder %s18, 1
      %p120 = scmp.ne.s32.totalorder %s115, %s117
      %p121 = scmp.eq.s32.totalorder %s18, 0
      %p122 = por %p120, %p121
      %p123 = scmp.ne.s32.totalorder %s115, %s117
      %p124 = scmp.eq.s32.totalorder %s23, 1
      %p125 = por %p123, %p124
      %p126 = scmp.ne.s32.totalorder %s117, %s118
      %p127 = scmp.eq.s32.totalorder %s23, 0
      %p128 = por %p126, %p127
      %p129 = scmp.ne.s32.totalorder %s117, %s118
      %p130 = scmp.eq.s32.totalorder %s24, 1
      %p131 = por %p129, %p130
      %p133 = scmp.ne.s32.totalorder %s118, %s132
      %p134 = scmp.eq.s32.totalorder %s24, 0
      %p135 = por %p133, %p134
      %s136 = ssub.s32 %s18, %s25
      %p137 = scmp.eq.s32.totalorder %s136, 0
      %s139 = sadd.s32 %s138, 1
      %s140 = scalar_select %p137, %s138, %s139
      %p143 = pneg %p137
      %p144 = scmp.eq.s32.totalorder %s18, 1
      %p145 = por %p143, %p144
      %p146 = scmp.ne.s32.totalorder %s138, %s141
      %p147 = scmp.eq.s32.totalorder %s18, 0
      %p148 = por %p146, %p147
      %p149 = scmp.ne.s32.totalorder %s138, %s141
      %p150 = scmp.eq.s32.totalorder %s23, 1
      %p151 = por %p149, %p150
      %p152 = scmp.ne.s32.totalorder %s141, %s142
      %p153 = scmp.eq.s32.totalorder %s23, 0
      %p154 = por %p152, %p153
      %p155 = scmp.ne.s32.totalorder %s141, %s142
      %p156 = scmp.eq.s32.totalorder %s24, 1
      %p157 = por %p155, %p156
      %p159 = scmp.ne.s32.totalorder %s142, %s158
      %p160 = scmp.eq.s32.totalorder %s24, 0
      %p161 = por %p159, %p160
      %p162 = scmp.le.s32.totalorder 1, %s18
      %p163 = scmp.lt.s32.totalorder %s18, 3
      %p164 = pnand %p162, %p163
      %p165 = pneg %p164
      // Predicated region
      $region9: #{tpu_custom_call.1} parent=5 // pred_check
        _
      $region10: #{tpu_custom_call.1} parent=5 // pred_check_branch
        %167 = sbr.rel (%p164) target = $region12
      $region11: #{tpu_custom_call.1} parent=5 // pred_region
        %s168 = ssub.s32 %s18, 1
        // Predicated region
        $region13: #{tpu_custom_call.1} parent=11 // pred_check
          %p169 = pneg %p65
        $region14: #{tpu_custom_call.1} parent=11 // pred_check_branch
          %171 = sbr.rel (%p169) target = $region16
        $region15: #{tpu_custom_call.1} parent=11 // pred_region
          %s173 = ssub.s32 4096, 4096
          %174 = vsyncadd [#allocation6], %s173
          %s175 = sshll.u32 [#allocation5], 4
          %s176 = int_to_ptr.vmem [resolvable:$true] %s175
          %181 = dma.hbm_to_vmem [thread:$0]  %s1, 4096, %s176, [#allocation6], 128, 128, 8
        $region16: #{tpu_custom_call.1} parent=11 // pred_fallthru
          _
        // Predicated region
        $region17: #{tpu_custom_call.1} parent=11 // pred_check
          %p182 = pneg %p86
        $region18: #{tpu_custom_call.1} parent=11 // pred_check_branch
          %184 = sbr.rel (%p182) target = $region20
        $region19: #{tpu_custom_call.1} parent=11 // pred_region
          _
        $region20: #{tpu_custom_call.1} parent=11 // pred_fallthru
          _
        // Predicated region
        $region21: #{tpu_custom_call.1} parent=11 // pred_check
          %p185 = pneg %p107
        $region22: #{tpu_custom_call.1} parent=11 // pred_check_branch
          %187 = sbr.rel (%p185) target = $region24
        $region23: #{tpu_custom_call.1} parent=11 // pred_region
          %s189 = ssub.s32 4096, 4096
          %190 = vsyncadd [#allocation6], %s189
          %s191 = sshll.u32 [#allocation7], 4
          %s192 = int_to_ptr.vmem [resolvable:$true] %s191
          %197 = dma.hbm_to_vmem [thread:$0]  %s3, 4096, %s192, [#allocation6], 256, 256, 16
        $region24: #{tpu_custom_call.1} parent=11 // pred_fallthru
          _
        // Predicated region
        $region25: #{tpu_custom_call.1} parent=11 // pred_check
          %p198 = pneg %p128
        $region26: #{tpu_custom_call.1} parent=11 // pred_check_branch
          %200 = sbr.rel (%p198) target = $region28
        $region27: #{tpu_custom_call.1} parent=11 // pred_region
          _
        $region28: #{tpu_custom_call.1} parent=11 // pred_fallthru
          _
      $region12: #{tpu_custom_call.1} parent=5 // pred_fallthru
        _
      %p201 = scmp.lt.s32.totalorder %s18, 2
      // Predicated region
      $region29: #{tpu_custom_call.1} parent=5 // pred_check
        %p202 = pneg %p201
      $region30: #{tpu_custom_call.1} parent=5 // pred_check_branch
        %204 = sbr.rel (%p202) target = $region32
      $region31: #{tpu_custom_call.1} parent=5 // pred_region
        // Predicated region
        $region33: #{tpu_custom_call.1} parent=31 // pred_check
          %p205 = pneg %p38
        $region34: #{tpu_custom_call.1} parent=31 // pred_check_branch
          %207 = sbr.rel (%p205) target = $region36
        $region35: #{tpu_custom_call.1} parent=31 // pred_region
          %s208 = sand.u32 %s28, 1
          %s209 = scalar_lea.sflag [#allocation3], %s208
          %s210 = sand.u32 %s28, 1
          %s211 = smul.addr %s210, 16
          %s212 = scalar_lea.vmem [#allocation2], %s211
          %s214 = ssub.s32 256, 256
          %215 = vsyncadd %s209, %s214
          %s216 = smul.addr %s18, 2
          %s217 = smul.addr %s216, 128
          %s218 = scalar_lea.hbm %s0, %s217
          %s220 = sshll.u32 %s212, 4
          %s221 = int_to_ptr.vmem [resolvable:$true] %s220
          %223 = dma.hbm_to_vmem [thread:$0]  %s218, 256, %s221, %s209
        $region36: #{tpu_custom_call.1} parent=31 // pred_fallthru
          _
      $region32: #{tpu_custom_call.1} parent=5 // pred_fallthru
        _
      %p224 = scmp.le.s32.totalorder 1, %s18
      %p225 = scmp.lt.s32.totalorder %s18, 3
      %p226 = pnand %p224, %p225
      %p227 = pneg %p226
      // Predicated region
      $region37: #{tpu_custom_call.1} parent=5 // pred_check
        _
      $region38: #{tpu_custom_call.1} parent=5 // pred_check_branch
        %229 = sbr.rel (%p226) target = $region40
      $region39: #{tpu_custom_call.1} parent=5 // pred_region
        %s230 = ssub.s32 %s18, 1
        %s231 = sand.u32 %s31, 1
        %s232 = scalar_lea.sflag [#allocation3], %s231
        %s233 = sand.u32 %s31, 1
        %s234 = smul.addr %s233, 16
        %s235 = scalar_lea.vmem [#allocation2], %s234
        // Predicated region
        $region41: #{tpu_custom_call.1} parent=39 // pred_check
          %p236 = pneg %p44
        $region42: #{tpu_custom_call.1} parent=39 // pred_check_branch
          %238 = sbr.rel (%p236) target = $region44
        $region43: #{tpu_custom_call.1} parent=39 // pred_region
          %239 = dma.done %s232, 256
        $region44: #{tpu_custom_call.1} parent=39 // pred_fallthru
          _
        // Predicated region
        $region45: #{tpu_custom_call.1} parent=39 // pred_check
          %p240 = pneg %p65
        $region46: #{tpu_custom_call.1} parent=39 // pred_check_branch
          %242 = sbr.rel (%p240) target = $region48
        $region47: #{tpu_custom_call.1} parent=39 // pred_region
          %243 = dma.done [#allocation6], 4096
        $region48: #{tpu_custom_call.1} parent=39 // pred_fallthru
          _
        // Predicated region
        $region49: #{tpu_custom_call.1} parent=39 // pred_check
          %p244 = pneg %p107
        $region50: #{tpu_custom_call.1} parent=39 // pred_check_branch
          %246 = sbr.rel (%p244) target = $region52
        $region51: #{tpu_custom_call.1} parent=39 // pred_region
          %247 = dma.done [#allocation6], 4096
        $region52: #{tpu_custom_call.1} parent=39 // pred_fallthru
          _
        %s248 = sand.u32 %s31, 1
        %s249 = scalar_lea.sflag [#allocation3], %s248
        %s250 = sand.u32 %s31, 1
        %s251 = smul.addr %s250, 16
        %s252 = scalar_lea.vmem [#allocation2], %s251
        %p253 = pneg %p44
        %p254 = pneg %p41
        %p255 = pneg %p65
        %p256 = pneg %p62
        %p257 = pneg %p86
        %p258 = pneg %p83
        %p259 = pneg %p107
        %p260 = pneg %p104
        %p261 = pneg %p128
        %p262 = pneg %p125
        %p263 = pneg %p154
        %p264 = pneg %p151
        %s265 = sand.u32 %s141, 1
        %s266 = scalar_lea.sflag [#allocation4], %s265
        %s267 = sand.u32 %s141, 1
        %s268 = smul.addr %s267, 16
        %s269 = scalar_lea.vmem [#allocation8], %s268
        %v270 = vld [vmem:[%s235] sm:$0xff]
        %v271 = vld [vmem:[%s235 + $0x8] sm:$0xff]
        %v272 = vld [vmem:[#allocation5] sm:$0xff]
        %v273 = vld [vmem:[#allocation5 + $0x8] sm:$0xff]
        %v274 = vld [vmem:[#allocation5 + $0x10] sm:$0xff]
        %v275 = vld [vmem:[#allocation5 + $0x18] sm:$0xff]
        %v276 = vld [vmem:[#allocation5 + $0x20] sm:$0xff]
        %v277 = vld [vmem:[#allocation5 + $0x28] sm:$0xff]
        %v278 = vld [vmem:[#allocation5 + $0x30] sm:$0xff]
        %v279 = vld [vmem:[#allocation5 + $0x38] sm:$0xff]
        %v280 = vld [vmem:[#allocation5 + $0x40] sm:$0xff]
        %v281 = vld [vmem:[#allocation5 + $0x48] sm:$0xff]
        %v282 = vld [vmem:[#allocation5 + $0x50] sm:$0xff]
        %v283 = vld [vmem:[#allocation5 + $0x58] sm:$0xff]
        %v284 = vld [vmem:[#allocation5 + $0x60] sm:$0xff]
        %v285 = vld [vmem:[#allocation5 + $0x68] sm:$0xff]
        %v286 = vld [vmem:[#allocation5 + $0x70] sm:$0xff]
        %v287 = vld [vmem:[#allocation5 + $0x78] sm:$0xff]
        %v288 = vld [vmem:[#allocation5 + $0x80] sm:$0xff]
        %v289 = vld [vmem:[#allocation5 + $0x88] sm:$0xff]
        %v290 = vld [vmem:[#allocation5 + $0x90] sm:$0xff]
        %v291 = vld [vmem:[#allocation5 + $0x98] sm:$0xff]
        %v292 = vld [vmem:[#allocation5 + $0xa0] sm:$0xff]
        %v293 = vld [vmem:[#allocation5 + $0xa8] sm:$0xff]
        %v294 = vld [vmem:[#allocation5 + $0xb0] sm:$0xff]
        %v295 = vld [vmem:[#allocation5 + $0xb8] sm:$0xff]
        %v296 = vld [vmem:[#allocation5 + $0xc0] sm:$0xff]
        %v297 = vld [vmem:[#allocation5 + $0xc8] sm:$0xff]
        %v298 = vld [vmem:[#allocation5 + $0xd0] sm:$0xff]
        %v299 = vld [vmem:[#allocation5 + $0xd8] sm:$0xff]
        %v300 = vld [vmem:[#allocation5 + $0xe0] sm:$0xff]
        %v301 = vld [vmem:[#allocation5 + $0xe8] sm:$0xff]
        %v302 = vld [vmem:[#allocation5 + $0xf0] sm:$0xff]
        %v303 = vld [vmem:[#allocation5 + $0xf8] sm:$0xff]
        %v304 = vld [vmem:[%s2] sm:$0x1]
        %v306 = vlaneseq
        %v307 = vshrl.u32 %v306, 7
        %v308 = vsub.s32 0, %v307
        %v309 = vrot.slane %v304, %v308
        %311 = vmatprep.subr.mxu0 0.0
        %312 = vmatpush1.msra.mxu0 %v272
        %313 = vmatprep.subr.mxu0 0.0
        %314 = vmatpush1.msra.mxu0 %v273
        %315 = vmatprep.subr.mxu0 0.0
        %316 = vmatpush1.msra.mxu0 %v274
        %317 = vmatprep.subr.mxu0 0.0
        %318 = vmatpush1.msra.mxu0 %v275
        %319 = vmatprep.subr.mxu0 0.0
        %320 = vmatpush1.msra.mxu0 %v276
        %321 = vmatprep.subr.mxu0 0.0
        %322 = vmatpush1.msra.mxu0 %v277
        %323 = vmatprep.subr.mxu0 0.0
        %324 = vmatpush1.msra.mxu0 %v278
        %325 = vmatprep.subr.mxu0 0.0
        %326 = vmatpush1.msra.mxu0 %v279
        %327 = vmatprep.subr.mxu0 0.0
        %328 = vmatpush1.msra.mxu0 %v280
        %329 = vmatprep.subr.mxu0 0.0
        %330 = vmatpush1.msra.mxu0 %v281
        %331 = vmatprep.subr.mxu0 0.0
        %332 = vmatpush1.msra.mxu0 %v282
        %333 = vmatprep.subr.mxu0 0.0
        %334 = vmatpush1.msra.mxu0 %v283
        %335 = vmatprep.subr.mxu0 0.0
        %336 = vmatpush1.msra.mxu0 %v284
        %337 = vmatprep.subr.mxu0 0.0
        %338 = vmatpush1.msra.mxu0 %v285
        %339 = vmatprep.subr.mxu0 0.0
        %340 = vmatpush1.msra.mxu0 %v286
        %341 = vmatprep.subr.mxu0 0.0
        %342 = vmatpush1.msra.mxu0 %v287
        %343 = vmatprep.subr.mxu0 0.0
        %344 = vmatpush1.msra.mxu0 %v288
        %345 = vmatprep.subr.mxu0 0.0
        %346 = vmatpush1.msra.mxu0 %v289
        %347 = vmatprep.subr.mxu0 0.0
        %348 = vmatpush1.msra.mxu0 %v290
        %349 = vmatprep.subr.mxu0 0.0
        %350 = vmatpush1.msra.mxu0 %v291
        %351 = vmatprep.subr.mxu0 0.0
        %352 = vmatpush1.msra.mxu0 %v292
        %353 = vmatprep.subr.mxu0 0.0
        %354 = vmatpush1.msra.mxu0 %v293
        %355 = vmatprep.subr.mxu0 0.0
        %356 = vmatpush1.msra.mxu0 %v294
        %357 = vmatprep.subr.mxu0 0.0
        %358 = vmatpush1.msra.mxu0 %v295
        %359 = vmatprep.subr.mxu0 0.0
        %360 = vmatpush1.msra.mxu0 %v296
        %361 = vmatprep.subr.mxu0 0.0
        %362 = vmatpush1.msra.mxu0 %v297
        %363 = vmatprep.subr.mxu0 0.0
        %364 = vmatpush1.msra.mxu0 %v298
        %365 = vmatprep.subr.mxu0 0.0
        %366 = vmatpush1.msra.mxu0 %v299
        %367 = vmatprep.subr.mxu0 0.0
        %368 = vmatpush1.msra.mxu0 %v300
        %369 = vmatprep.subr.mxu0 0.0
        %370 = vmatpush1.msra.mxu0 %v301
        %371 = vmatprep.subr.mxu0 0.0
        %372 = vmatpush1.msra.mxu0 %v302
        %373 = vmatprep.subr.mxu0 0.0
        %374 = vmatpush1.msra.mxu0 %v303
        %375 = vmatprep.mubr.f32.mxu0 %v271
        %376 = vmatmul.mubr.f32.gmra.mrb[0].mxu0 %v270
        %v377 = vpop.f32.mrb[0].mxu0
        %v378 = vadd.f32 %v309, %v377
        %v379 = vpop.f32.mrb[0].mxu0
        %380 = vdwg.mxu0
        %v381 = vmax.f32 %v378, 0.0
        %v382 = vld [vmem:[#allocation7] sm:$0xff]
        %v383 = vld [vmem:[#allocation7 + $0x8] sm:$0xff]
        %v384 = vld [vmem:[#allocation7 + $0x10] sm:$0xff]
        %v385 = vld [vmem:[#allocation7 + $0x18] sm:$0xff]
        %v386 = vld [vmem:[#allocation7 + $0x20] sm:$0xff]
        %v387 = vld [vmem:[#allocation7 + $0x28] sm:$0xff]
        %v388 = vld [vmem:[#allocation7 + $0x30] sm:$0xff]
        %v389 = vld [vmem:[#allocation7 + $0x38] sm:$0xff]
        %v390 = vld [vmem:[#allocation7 + $0x40] sm:$0xff]
        %v391 = vld [vmem:[#allocation7 + $0x48] sm:$0xff]
        %v392 = vld [vmem:[#allocation7 + $0x50] sm:$0xff]
        %v393 = vld [vmem:[#allocation7 + $0x58] sm:$0xff]
        %v394 = vld [vmem:[#allocation7 + $0x60] sm:$0xff]
        %v395 = vld [vmem:[#allocation7 + $0x68] sm:$0xff]
        %v396 = vld [vmem:[#allocation7 + $0x70] sm:$0xff]
        %v397 = vld [vmem:[#allocation7 + $0x78] sm:$0xff]
        %v398 = vld [vmem:[#allocation7 + $0x80] sm:$0xff]
        %v399 = vld [vmem:[#allocation7 + $0x88] sm:$0xff]
        %v400 = vld [vmem:[#allocation7 + $0x90] sm:$0xff]
        %v401 = vld [vmem:[#allocation7 + $0x98] sm:$0xff]
        %v402 = vld [vmem:[#allocation7 + $0xa0] sm:$0xff]
        %v403 = vld [vmem:[#allocation7 + $0xa8] sm:$0xff]
        %v404 = vld [vmem:[#allocation7 + $0xb0] sm:$0xff]
        %v405 = vld [vmem:[#allocation7 + $0xb8] sm:$0xff]
        %v406 = vld [vmem:[#allocation7 + $0xc0] sm:$0xff]
        %v407 = vld [vmem:[#allocation7 + $0xc8] sm:$0xff]
        %v408 = vld [vmem:[#allocation7 + $0xd0] sm:$0xff]
        %v409 = vld [vmem:[#allocation7 + $0xd8] sm:$0xff]
        %v410 = vld [vmem:[#allocation7 + $0xe0] sm:$0xff]
        %v411 = vld [vmem:[#allocation7 + $0xe8] sm:$0xff]
        %v412 = vld [vmem:[#allocation7 + $0xf0] sm:$0xff]
        %v413 = vld [vmem:[#allocation7 + $0xf8] sm:$0xff]
        %v414 = vld [vmem:[%s4] sm:$0x3]
        %v416 = vlaneseq
        %v417 = vshrl.u32 %v416, 7
        %v418 = vsub.s32 0, %v417
        %v419 = vrot.slane %v414, %v418
        %v420 = vlaneseq
        %v421 = vshrl.u32 %v420, 7
        %v422 = vsub.s32 1, %v421
        %v423 = vrot.slane %v414, %v422
        %426 = vmatprep.subr.mxu0 %v383
        %427 = vmatpush1.msra.mxu0 %v382
        %428 = vmatprep.subr.mxu0 %v385
        %429 = vmatpush1.msra.mxu0 %v384
        %430 = vmatprep.subr.mxu0 %v387
        %431 = vmatpush1.msra.mxu0 %v386
        %432 = vmatprep.subr.mxu0 %v389
        %433 = vmatpush1.msra.mxu0 %v388
        %434 = vmatprep.subr.mxu0 %v391
        %435 = vmatpush1.msra.mxu0 %v390
        %436 = vmatprep.subr.mxu0 %v393
        %437 = vmatpush1.msra.mxu0 %v392
        %438 = vmatprep.subr.mxu0 %v395
        %439 = vmatpush1.msra.mxu0 %v394
        %440 = vmatprep.subr.mxu0 %v397
        %441 = vmatpush1.msra.mxu0 %v396
        %442 = vmatprep.subr.mxu0 %v399
        %443 = vmatpush1.msra.mxu0 %v398
        %444 = vmatprep.subr.mxu0 %v401
        %445 = vmatpush1.msra.mxu0 %v400
        %446 = vmatprep.subr.mxu0 %v403
        %447 = vmatpush1.msra.mxu0 %v402
        %448 = vmatprep.subr.mxu0 %v405
        %449 = vmatpush1.msra.mxu0 %v404
        %450 = vmatprep.subr.mxu0 %v407
        %451 = vmatpush1.msra.mxu0 %v406
        %452 = vmatprep.subr.mxu0 %v409
        %453 = vmatpush1.msra.mxu0 %v408
        %454 = vmatprep.subr.mxu0 %v411
        %455 = vmatpush1.msra.mxu0 %v410
        %456 = vmatprep.subr.mxu0 %v413
        %457 = vmatpush1.msra.mxu0 %v412
        %458 = vmatprep.subr.mxu0 0.0
        %459 = vmatpush1.msra.mxu0 0.0
        %460 = vmatprep.subr.mxu0 0.0
        %461 = vmatpush1.msra.mxu0 0.0
        %462 = vmatprep.subr.mxu0 0.0
        %463 = vmatpush1.msra.mxu0 0.0
        %464 = vmatprep.subr.mxu0 0.0
        %465 = vmatpush1.msra.mxu0 0.0
        %466 = vmatprep.subr.mxu0 0.0
        %467 = vmatpush1.msra.mxu0 0.0
        %468 = vmatprep.subr.mxu0 0.0
        %469 = vmatpush1.msra.mxu0 0.0
        %470 = vmatprep.subr.mxu0 0.0
        %471 = vmatpush1.msra.mxu0 0.0
        %472 = vmatprep.subr.mxu0 0.0
        %473 = vmatpush1.msra.mxu0 0.0
        %474 = vmatprep.subr.mxu0 0.0
        %475 = vmatpush1.msra.mxu0 0.0
        %476 = vmatprep.subr.mxu0 0.0
        %477 = vmatpush1.msra.mxu0 0.0
        %478 = vmatprep.subr.mxu0 0.0
        %479 = vmatpush1.msra.mxu0 0.0
        %480 = vmatprep.subr.mxu0 0.0
        %481 = vmatpush1.msra.mxu0 0.0
        %482 = vmatprep.subr.mxu0 0.0
        %483 = vmatpush1.msra.mxu0 0.0
        %484 = vmatprep.subr.mxu0 0.0
        %485 = vmatpush1.msra.mxu0 0.0
        %486 = vmatprep.subr.mxu0 0.0
        %487 = vmatpush1.msra.mxu0 0.0
        %488 = vmatprep.subr.mxu0 0.0
        %489 = vmatpush1.msra.mxu0 0.0
        %490 = vmatprep.mubr.f32.mxu0 0.0
        %491 = vmatmul.mubr.f32.gmra.mrb[0].mxu0 %v381
        %v492 = vpop.f32.mrb[0].mxu0
        %v493 = vadd.f32 %v419, %v492
        %v494 = vpop.f32.mrb[0].mxu0
        %v495 = vadd.f32 %v423, %v494
        %496 = vdwg.mxu0
        %497 = vst [vmem:[%s269] sm:$0xff] %v493
        %498 = vst [vmem:[%s269 + $0x8] sm:$0xff] %v495
        %s499 = sand.u32 %s141, 1
        %s500 = scalar_lea.sflag [#allocation4], %s499
        %s501 = sand.u32 %s141, 1
        %s502 = smul.addr %s501, 16
        %s503 = scalar_lea.vmem [#allocation8], %s502
        // Predicated region
        $region53: #{tpu_custom_call.1} parent=39 // pred_check
          %p504 = pneg %p151
        $region54: #{tpu_custom_call.1} parent=39 // pred_check_branch
          %506 = sbr.rel (%p504) target = $region56
        $region55: #{tpu_custom_call.1} parent=39 // pred_region
          %s508 = ssub.s32 256, 256
          %509 = vsyncadd %s500, %s508
          %s510 = smul.addr %s23, 2
          %s511 = smul.addr %s510, 128
          %s512 = scalar_lea.hbm %s5, %s511
          %s514 = sshll.u32 %s503, 4
          %s515 = int_to_ptr.vmem [resolvable:$true] %s514
          %517 = dma.vmem_to_hbm [thread:$0]  %s515, 256, %s512, %s500
        $region56: #{tpu_custom_call.1} parent=39 // pred_fallthru
          _
      $region40: #{tpu_custom_call.1} parent=5 // pred_fallthru
        _
      %p518 = scmp.le.s32.totalorder 2, %s18
      // Predicated region
      $region57: #{tpu_custom_call.1} parent=5 // pred_check
        %p519 = pneg %p518
      $region58: #{tpu_custom_call.1} parent=5 // pred_check_branch
        %521 = sbr.rel (%p519) target = $region60
      $region59: #{tpu_custom_call.1} parent=5 // pred_region
        %s522 = ssub.s32 %s18, 2
        // Predicated region
        $region61: #{tpu_custom_call.1} parent=59 // pred_check
          %p523 = pneg %p157
        $region62: #{tpu_custom_call.1} parent=59 // pred_check_branch
          %525 = sbr.rel (%p523) target = $region64
        $region63: #{tpu_custom_call.1} parent=59 // pred_region
          %s526 = sand.u32 %s142, 1
          %s527 = scalar_lea.sflag [#allocation4], %s526
          %s528 = sand.u32 %s142, 1
          %s529 = smul.addr %s528, 16
          %s530 = scalar_lea.vmem [#allocation8], %s529
          %531 = dma.done %s527, 256
        $region64: #{tpu_custom_call.1} parent=59 // pred_fallthru
          _
      $region60: #{tpu_custom_call.1} parent=5 // pred_fallthru
        _
    $region6: #{tpu_custom_call.1} parent=1 // loop_footer
      %s22 = sadd.s32 1, %s18
    $region7: #{tpu_custom_call.1} parent=1 // loop_footer_branch
      %17 = sbr.rel target = $region3
    $region8: #{tpu_custom_call.1} parent=1 // loop_exit
      _
    %532 = vsyncpa [#allocation3], 1
    %s533 = scalar_lea.sflag [#allocation3], 1
    %534 = vsyncpa %s533, 1
    %535 = vsyncpa [#allocation6], 1
    %536 = vsyncpa [#allocation4], 1
    %s537 = scalar_lea.sflag [#allocation4], 1
    %538 = vsyncpa %s537, 1

</llo_original>
